<compile_context>
chip_gen: v7x
topology: tpu7x:2x2x1
jax: 0.10.0
libtpu: 0.0.40
codegen_flags: <defaults>
</compile_context>

<pallas_src>
import functools

import jax
import jax.numpy as jnp
from jax import lax
from jax.experimental import pallas as pl
from jax.experimental.pallas import tpu as pltpu

_MAX_BLK_ONEHOT = 256   # max rows per grid step for the one-hot MXU path
_MAX_BLK_GATHER = 512   # max rows per grid step for the DMA row-gather paths
_DMA_WINDOW = 16        # row-gather DMAs kept in flight per grid step


def _round_up(x, m):
    return (x + m - 1) // m * m


def _row_align(dtype):
    # Sublane packing: 8 rows for 32-bit, 16 for 16-bit, 32 for 8-bit dtypes.
    return max(8, 32 // jnp.dtype(dtype).itemsize)


def _vmem_capacity_bytes():
    try:
        cap = getattr(pltpu.get_tpu_info(), "vmem_capacity_bytes", None)
        if cap:
            return int(cap)
    except Exception:
        pass
    return 64 * 1024 * 1024   # conservative fallback: v7x per-TensorCore VMEM


def _default_onehot_max_vocab():
    # v5e's MXU is ~4.7x slower (4x128^2 @ 197 TF/s), so the one-hot matmul
    # crosses over to the direct gather at a smaller vocab there.
    try:
        kind = jax.devices()[0].device_kind.lower()
    except Exception:
        kind = ""
    return 1024 if "v5" in kind else 2048


def _vmem_limit(need_bytes, cap_bytes):
    # ~20% headroom for compiler-internal scratch / spills, floored at the
    # smallest default scoped limit and capped below physical capacity.
    limit = int(need_bytes * 1.2) + (2 << 20)
    limit = max(limit, 16 << 20)
    return int(min(limit, int(cap_bytes * 0.9)))


def pad_table(table):
    """Pad an embedding table to TPU-friendly alignment ONCE, at init time.

    Rows -> sublane-packing multiple (8 for f32, 16 for bf16), cols -> 128
    (lane width). Doing this inside the lookup would cost a full HBM copy of
    the table on every call.
    """
    v, d = table.shape
    ra = _row_align(table.dtype)
    v_pad, d_pad = _round_up(v, ra), _round_up(d, 128)
    if (v_pad, d_pad) != (v, d):
        table = jnp.pad(table, ((0, v_pad - v), (0, d_pad - d)))
    return table


def _onehot_gather_kernel(ids_ref, table_ref, out_ref):
    # ids_ref  : VMEM (BLK, 1) int32      (this tile's token ids)
    # table_ref: VMEM (V_pad, D_pad)      (whole table, resident, 1 buffer)
    # out_ref  : VMEM (BLK, D_pad)
    blk = out_ref.shape[0]
    v_pad = table_ref.shape[0]
    ids = ids_ref[...]                                       # (BLK, 1)
    # NOTE: the iota is rebuilt every grid step on purpose. Caching it in a
    # VMEM scratch under pl.when(program_id == 0) is unsafe together with
    # dimension_semantics=("parallel",): the second TensorCore never executes
    # program_id 0 and would read uninitialized scratch.
    iota = lax.broadcasted_iota(jnp.int32, (blk, v_pad), 1)  # (BLK, V_pad)
    onehot = (iota == ids).astype(table_ref.dtype)           # table-native dtype
    # f32 tables: force full-precision passes so gathered rows match the
    # source bit-for-bit (default precision may truncate to bf16). bf16 rows
    # are exact in a single MXU pass already.
    prec = lax.Precision.HIGHEST if table_ref.dtype == jnp.float32 else None
    out_ref[...] = jnp.dot(
        onehot, table_ref[...],
        preferred_element_type=jnp.float32, precision=prec,
    ).astype(out_ref.dtype)


def _dma_row_gather_kernel(ids_ref, table_ref, out_ref, sem, *, window):
    # ids_ref  : SMEM (N_pad,) int32      (scalar prefetch)
    # table_ref: (V_pad, D_pad) in VMEM (resident path) or HBM (pl.ANY path)
    # out_ref  : VMEM (BLK, D_pad)
    # sem      : DMA semaphores, shape (window,)
    #
    # Each output row is one DMA (table row -> out row): no single-sublane
    # vector loads, no jnp.concatenate, no vreg/XLU cost. `window` copies are
    # kept in flight; slot s is reused only after its previous copy is waited.
    blk = out_ref.shape[0]
    base = pl.program_id(0) * blk

    def issue(row):
        idx = ids_ref[base + row]
        pltpu.make_async_copy(
            table_ref.at[pl.ds(idx, 1), :],
            out_ref.at[pl.ds(row, 1), :],
            sem.at[row % window],
        ).start()

    def wait_for(row):
        # Same-shaped descriptor: only the semaphore + byte count matter.
        pltpu.make_async_copy(
            table_ref.at[pl.ds(0, 1), :],
            out_ref.at[pl.ds(0, 1), :],
            sem.at[row % window],
        ).wait()

    n_prologue = min(window, blk)          # static
    for r in range(n_prologue):
        issue(r)

    def body(r, carry):
        wait_for(r)                        # copy r is complete

        @pl.when(r + window < blk)
        def _():
            issue(r + window)              # keep `window` copies in flight

        return carry

    lax.fori_loop(0, blk, body, 0)
    # TODO(synk): for sub-32-bit tables with very narrow rows, pack row pairs
    # via pltpu.bitcast-to-u32 before the per-row DMA scatter.


def prompt_embedding_lookup(indices, table, *, vocab_size=None, embed_dim=None,
                            onehot_max_vocab=None, gather_path=None):
    """Row gather of `table` at `indices` (== F.embedding with default args).

    `table` is the concatenated [embed.weight; new_embed.weight] table,
    preferably pre-padded once with `pad_table` (pass the logical
    `vocab_size` / `embed_dim` in that case). `gather_path` forces a path:
    "onehot" (MXU one-hot matmul), "vmem" (VMEM-resident DMA row gather) or
    "hbm" (table stays in HBM, rows DMA'd straight into the output tile).
    """
    v_rows, d_cols = table.shape
    v_total = int(vocab_size) if vocab_size is not None else v_rows
    d = int(embed_dim) if embed_dim is not None else d_cols

    orig_shape = indices.shape
    flat = indices.reshape(-1).astype(jnp.int32)
    n = flat.shape[0]

    # PyTorch F.embedding raises on OOB ids; TPU dynamic reads / DMAs are
    # unchecked, so clamp defensively instead (documented divergence).
    flat = jnp.clip(flat, 0, v_total - 1)

    # Lane-dense output (D multiple of 128) + sublane-aligned rows. This pad
    # is a full HBM copy of the table, so pre-pad once with pad_table() and
    # this branch becomes a no-op per call.
    v_pad = _round_up(v_rows, 8)
    d_pad = _round_up(d_cols, 128)
    if (v_pad, d_pad) != (v_rows, d_cols):
        table = jnp.pad(table, ((0, v_pad - v_rows), (0, d_pad - d_cols)))

    itemsize = jnp.dtype(table.dtype).itemsize
    ra = _row_align(table.dtype)
    table_bytes = v_pad * d_pad * itemsize
    cap = _vmem_capacity_bytes()
    budget = int(cap * 0.75)   # room for pipeline buffers / internal scratch
    if onehot_max_vocab is None:
        onehot_max_vocab = _default_onehot_max_vocab()

    def pick_blk(max_blk):
        blk = max(ra, min(max_blk, _round_up(n, ra)))
        # Give v7x's two TensorCores >= 2 "parallel" grid steps when possible.
        if _round_up(n, blk) // blk < 2:
            half = _round_up(-(-n // 2), ra)
            if half >= ra and _round_up(n, half) // half >= 2:
                blk = half
        # Keep the double-buffered output tile within budget for huge D.
        while blk > ra and 2 * blk * d_pad * itemsize > budget:
            blk = max(ra, _round_up(blk // 2, ra))
        return blk

    if gather_path is None:
        blk_oh = pick_blk(_MAX_BLK_ONEHOT)
        onehot_need = (table_bytes + 2 * blk_oh * d_pad * itemsize
                       + 2 * blk_oh * 4 + blk_oh * v_pad * itemsize)
        blk_rg = pick_blk(_MAX_BLK_GATHER)
        resident_need = table_bytes + 2 * blk_rg * d_pad * itemsize
        if (itemsize <= 2 and v_pad <= onehot_max_vocab
                and onehot_need <= budget):
            # f32 tables skip the one-hot path: the direct DMA gather is both
            # bit-exact and avoids the multi-pass f32 MXU cost.
            gather_path = "onehot"
        elif resident_need <= budget:
            gather_path = "vmem"
        else:
            gather_path = "hbm"

    if gather_path == "onehot":
        blk = pick_blk(_MAX_BLK_ONEHOT)
        n_pad = _round_up(n, blk)
        ids = jnp.pad(flat, (0, n_pad - n)) if n_pad != n else flat
        need = (table_bytes + 2 * blk * d_pad * itemsize
                + 2 * blk * 4 + blk * v_pad * itemsize)
        # TODO(synk): for very large D on v7x, add a second grid axis over D
        # (d_tile ~512-1024) so the resident table block shrinks accordingly.
        out = pl.pallas_call(
            _onehot_gather_kernel,
            out_shape=jax.ShapeDtypeStruct((n_pad, d_pad), table.dtype),
            grid_spec=pltpu.PrefetchScalarGridSpec(
                num_scalar_prefetch=0,
                grid=(n_pad // blk,),
                in_specs=[
                    pl.BlockSpec((blk, 1), lambda i: (i, 0)),
                    # Constant index_map -> never re-DMA'd; single-buffer it.
                    pl.BlockSpec((v_pad, d_pad), lambda i: (0, 0),
                                 pipeline_mode=pl.Buffered(1)),
                ],
                out_specs=pl.BlockSpec((blk, d_pad), lambda i: (i, 0)),
            ),
            compiler_params=pltpu.CompilerParams(
                dimension_semantics=("parallel",),
                vmem_limit_bytes=_vmem_limit(need, cap)),
        )(ids.reshape(n_pad, 1), table)
    else:
        blk = pick_blk(_MAX_BLK_GATHER)
        n_pad = _round_up(n, blk)
        ids = jnp.pad(flat, (0, n_pad - n)) if n_pad != n else flat
        if gather_path == "vmem":
            # Whole table resident in VMEM (fits the per-core budget).
            table_spec = pl.BlockSpec((v_pad, d_pad), lambda i, ids_r: (0, 0),
                                      pipeline_mode=pl.Buffered(1))
            need = table_bytes + 2 * blk * d_pad * itemsize
        elif gather_path == "hbm":
            # Table too big for VMEM (e.g. v7x's 64 MiB per core): leave it in
            # HBM and DMA rows straight into the output tile.
            table_spec = pl.BlockSpec(memory_space=pl.ANY)
            need = 2 * blk * d_pad * itemsize
        else:
            raise ValueError(f"unknown gather_path: {gather_path!r}")
        out = pl.pallas_call(
            functools.partial(_dma_row_gather_kernel, window=_DMA_WINDOW),
            out_shape=jax.ShapeDtypeStruct((n_pad, d_pad), table.dtype),
            grid_spec=pltpu.PrefetchScalarGridSpec(
                num_scalar_prefetch=1,
                grid=(n_pad // blk,),
                in_specs=[table_spec],
                out_specs=pl.BlockSpec((blk, d_pad), lambda i, ids_r: (i, 0)),
                scratch_shapes=[pltpu.SemaphoreType.DMA((_DMA_WINDOW,))],
            ),
            compiler_params=pltpu.CompilerParams(
                dimension_semantics=("parallel",),
                vmem_limit_bytes=_vmem_limit(need, cap)),
        )(ids, table)

    return out[:n, :d].reshape(orig_shape + (d,))


if __name__ == "__main__":
    key = jax.random.PRNGKey(0)
    k_embed, k_perm, k_idx = jax.random.split(key, 3)

    # Small synthetic shapes consistent with the module.
    vocab_size = 512        # base embedding vocab
    embed_dim = 128         # embedding_dim
    n_prefix = 8            # number of new prompt tokens
    batch, seq = 2, 8       # input index shape

    embed_weight = jax.random.normal(k_embed, (vocab_size, embed_dim),
                                     dtype=jnp.float32)
    # new_embed initialized from a permutation of existing rows (the original
    # module permutes range(5000); we permute the base vocab at this scale).
    perm = jax.random.permutation(k_perm, vocab_size)[:n_prefix]
    new_embed_weight = embed_weight[perm]

    # cat([embed.weight, new_embed.weight], 0) + alignment padding, done ONCE
    # at init time (not per lookup).
    full_table = jnp.concatenate([embed_weight, new_embed_weight], axis=0)
    v_total, d = full_table.shape
    padded_table = pad_table(full_table)

    # Input ids may address both the original vocab and the new prefix rows.
    input_ids = jax.random.randint(k_idx, (batch, seq), 0, v_total,
                                   dtype=jnp.int32)
    ref = jnp.take(full_table, input_ids, axis=0)

    # 1) Auto dispatch: f32 table -> VMEM-resident DMA row gather (bit-exact).
    out = prompt_embedding_lookup(input_ids, padded_table,
                                  vocab_size=v_total, embed_dim=d)
    out = jax.block_until_ready(out)
    assert out.shape == (batch, seq, embed_dim)
    assert jnp.allclose(out, ref), "auto (vmem gather) mismatch vs reference"

    # 2) Large-vocab / v7x path: table stays in HBM, rows DMA'd to the output.
    out_hbm = prompt_embedding_lookup(input_ids, padded_table,
                                      vocab_size=v_total, embed_dim=d,
                                      gather_path="hbm")
    out_hbm = jax.block_until_ready(out_hbm)
    assert jnp.allclose(out_hbm, ref), "hbm gather mismatch vs reference"

    # 3) One-hot MXU path (prefix-tuning small-table case) on a bf16 table.
    table_bf16 = pad_table(full_table.astype(jnp.bfloat16))
    ref_bf16 = jnp.take(full_table.astype(jnp.bfloat16), input_ids, axis=0)
    out_oh = prompt_embedding_lookup(input_ids, table_bf16,
                                     vocab_size=v_total, embed_dim=d,
                                     gather_path="onehot")
    out_oh = jax.block_until_ready(out_oh)
    assert jnp.allclose(out_oh.astype(jnp.float32),
                        ref_bf16.astype(jnp.float32)), \
        "one-hot gather mismatch vs reference"

    print("KERNEL_OK")
</pallas_src>

<mosaic_0001>
module attributes {stable_mosaic.version = 11 : i64} {
  func.func @_dma_row_gather_kernel(%arg0: i32, %arg1: memref<16xi32, #tpu.memory_space<smem>>, %arg2: memref<520x128xf32, #tpu.memory_space<vmem>>, %arg3: memref<8x128xf32, #tpu.memory_space<vmem>>, %arg4: memref<16x!tpu.dma_semaphore, #tpu.memory_space<semaphore_mem>>) attributes {dimension_semantics = [#tpu.dimension_semantics<parallel>], iteration_bounds = array<i64: 2>, scalar_prefetch = 1 : i64, scratch_operands = 1 : i64, tpu.core_type = #tpu.core_type<tc>, window_params = [{pipeline_mode = #tpu.pipeline_mode<synchronous>, transform_indices = @transform_0, window_bounds = array<i64: 520, 128>}, {transform_indices = @transform_1, window_bounds = array<i64: 8, 128>}]} {
    %c8_i32 = arith.constant 8 : i32
    %0 = arith.muli %arg0, %c8_i32 : i32
    %c0_i32 = arith.constant 0 : i32
    %1 = arith.addi %0, %c0_i32 : i32
    %2 = arith.index_cast %1 : i32 to index
    %3 = memref.load %arg1[%2] : memref<16xi32, #tpu.memory_space<smem>>
    %c0_i32_0 = arith.constant 0 : i32
    %c0_i32_1 = arith.constant 0 : i32
    %4 = tpu.memref_slice %arg2[%3, %c0_i32_1] : memref<520x128xf32, #tpu.memory_space<vmem>> -> memref<1x128xf32, #tpu.memory_space<vmem>>
    %c0_i32_2 = arith.constant 0 : i32
    %c0_i32_3 = arith.constant 0 : i32
    %5 = tpu.memref_slice %arg3[%c0_i32_2, %c0_i32_3] : memref<8x128xf32, #tpu.memory_space<vmem>> -> memref<1x128xf32, #tpu.memory_space<vmem>>
    %6 = tpu.memref_slice %arg4[%c0_i32_0] : memref<16x!tpu.dma_semaphore, #tpu.memory_space<semaphore_mem>> -> memref<1x!tpu.dma_semaphore, #tpu.memory_space<semaphore_mem>>
    %7 = tpu.memref_squeeze %6 : memref<1x!tpu.dma_semaphore, #tpu.memory_space<semaphore_mem>> -> memref<!tpu.dma_semaphore, #tpu.memory_space<semaphore_mem>>
    tpu.enqueue_dma source(%4 : memref<1x128xf32, #tpu.memory_space<vmem>>) target(%5 : memref<1x128xf32, #tpu.memory_space<vmem>>) target_semaphore(%7 : memref<!tpu.dma_semaphore, #tpu.memory_space<semaphore_mem>>)
    %c1_i32 = arith.constant 1 : i32
    %8 = arith.addi %0, %c1_i32 : i32
    %9 = arith.index_cast %8 : i32 to index
    %10 = memref.load %arg1[%9] : memref<16xi32, #tpu.memory_space<smem>>
    %c1_i32_4 = arith.constant 1 : i32
    %c0_i32_5 = arith.constant 0 : i32
    %11 = tpu.memref_slice %arg2[%10, %c0_i32_5] : memref<520x128xf32, #tpu.memory_space<vmem>> -> memref<1x128xf32, #tpu.memory_space<vmem>>
    %c1_i32_6 = arith.constant 1 : i32
    %c0_i32_7 = arith.constant 0 : i32
    %12 = tpu.memref_slice %arg3[%c1_i32_6, %c0_i32_7] : memref<8x128xf32, #tpu.memory_space<vmem>> -> memref<1x128xf32, #tpu.memory_space<vmem>>
    %13 = tpu.memref_slice %arg4[%c1_i32_4] : memref<16x!tpu.dma_semaphore, #tpu.memory_space<semaphore_mem>> -> memref<1x!tpu.dma_semaphore, #tpu.memory_space<semaphore_mem>>
    %14 = tpu.memref_squeeze %13 : memref<1x!tpu.dma_semaphore, #tpu.memory_space<semaphore_mem>> -> memref<!tpu.dma_semaphore, #tpu.memory_space<semaphore_mem>>
    tpu.enqueue_dma source(%11 : memref<1x128xf32, #tpu.memory_space<vmem>>) target(%12 : memref<1x128xf32, #tpu.memory_space<vmem>>) target_semaphore(%14 : memref<!tpu.dma_semaphore, #tpu.memory_space<semaphore_mem>>)
    %c2_i32 = arith.constant 2 : i32
    %15 = arith.addi %0, %c2_i32 : i32
    %16 = arith.index_cast %15 : i32 to index
    %17 = memref.load %arg1[%16] : memref<16xi32, #tpu.memory_space<smem>>
    %c2_i32_8 = arith.constant 2 : i32
    %c0_i32_9 = arith.constant 0 : i32
    %18 = tpu.memref_slice %arg2[%17, %c0_i32_9] : memref<520x128xf32, #tpu.memory_space<vmem>> -> memref<1x128xf32, #tpu.memory_space<vmem>>
    %c2_i32_10 = arith.constant 2 : i32
    %c0_i32_11 = arith.constant 0 : i32
    %19 = tpu.memref_slice %arg3[%c2_i32_10, %c0_i32_11] : memref<8x128xf32, #tpu.memory_space<vmem>> -> memref<1x128xf32, #tpu.memory_space<vmem>>
    %20 = tpu.memref_slice %arg4[%c2_i32_8] : memref<16x!tpu.dma_semaphore, #tpu.memory_space<semaphore_mem>> -> memref<1x!tpu.dma_semaphore, #tpu.memory_space<semaphore_mem>>
    %21 = tpu.memref_squeeze %20 : memref<1x!tpu.dma_semaphore, #tpu.memory_space<semaphore_mem>> -> memref<!tpu.dma_semaphore, #tpu.memory_space<semaphore_mem>>
    tpu.enqueue_dma source(%18 : memref<1x128xf32, #tpu.memory_space<vmem>>) target(%19 : memref<1x128xf32, #tpu.memory_space<vmem>>) target_semaphore(%21 : memref<!tpu.dma_semaphore, #tpu.memory_space<semaphore_mem>>)
    %c3_i32 = arith.constant 3 : i32
    %22 = arith.addi %0, %c3_i32 : i32
    %23 = arith.index_cast %22 : i32 to index
    %24 = memref.load %arg1[%23] : memref<16xi32, #tpu.memory_space<smem>>
    %c3_i32_12 = arith.constant 3 : i32
    %c0_i32_13 = arith.constant 0 : i32
    %25 = tpu.memref_slice %arg2[%24, %c0_i32_13] : memref<520x128xf32, #tpu.memory_space<vmem>> -> memref<1x128xf32, #tpu.memory_space<vmem>>
    %c3_i32_14 = arith.constant 3 : i32
    %c0_i32_15 = arith.constant 0 : i32
    %26 = tpu.memref_slice %arg3[%c3_i32_14, %c0_i32_15] : memref<8x128xf32, #tpu.memory_space<vmem>> -> memref<1x128xf32, #tpu.memory_space<vmem>>
    %27 = tpu.memref_slice %arg4[%c3_i32_12] : memref<16x!tpu.dma_semaphore, #tpu.memory_space<semaphore_mem>> -> memref<1x!tpu.dma_semaphore, #tpu.memory_space<semaphore_mem>>
    %28 = tpu.memref_squeeze %27 : memref<1x!tpu.dma_semaphore, #tpu.memory_space<semaphore_mem>> -> memref<!tpu.dma_semaphore, #tpu.memory_space<semaphore_mem>>
    tpu.enqueue_dma source(%25 : memref<1x128xf32, #tpu.memory_space<vmem>>) target(%26 : memref<1x128xf32, #tpu.memory_space<vmem>>) target_semaphore(%28 : memref<!tpu.dma_semaphore, #tpu.memory_space<semaphore_mem>>)
    %c4_i32 = arith.constant 4 : i32
    %29 = arith.addi %0, %c4_i32 : i32
    %30 = arith.index_cast %29 : i32 to index
    %31 = memref.load %arg1[%30] : memref<16xi32, #tpu.memory_space<smem>>
    %c4_i32_16 = arith.constant 4 : i32
    %c0_i32_17 = arith.constant 0 : i32
    %32 = tpu.memref_slice %arg2[%31, %c0_i32_17] : memref<520x128xf32, #tpu.memory_space<vmem>> -> memref<1x128xf32, #tpu.memory_space<vmem>>
    %c4_i32_18 = arith.constant 4 : i32
    %c0_i32_19 = arith.constant 0 : i32
    %33 = tpu.memref_slice %arg3[%c4_i32_18, %c0_i32_19] : memref<8x128xf32, #tpu.memory_space<vmem>> -> memref<1x128xf32, #tpu.memory_space<vmem>>
    %34 = tpu.memref_slice %arg4[%c4_i32_16] : memref<16x!tpu.dma_semaphore, #tpu.memory_space<semaphore_mem>> -> memref<1x!tpu.dma_semaphore, #tpu.memory_space<semaphore_mem>>
    %35 = tpu.memref_squeeze %34 : memref<1x!tpu.dma_semaphore, #tpu.memory_space<semaphore_mem>> -> memref<!tpu.dma_semaphore, #tpu.memory_space<semaphore_mem>>
    tpu.enqueue_dma source(%32 : memref<1x128xf32, #tpu.memory_space<vmem>>) target(%33 : memref<1x128xf32, #tpu.memory_space<vmem>>) target_semaphore(%35 : memref<!tpu.dma_semaphore, #tpu.memory_space<semaphore_mem>>)
    %c5_i32 = arith.constant 5 : i32
    %36 = arith.addi %0, %c5_i32 : i32
    %37 = arith.index_cast %36 : i32 to index
    %38 = memref.load %arg1[%37] : memref<16xi32, #tpu.memory_space<smem>>
    %c5_i32_20 = arith.constant 5 : i32
    %c0_i32_21 = arith.constant 0 : i32
    %39 = tpu.memref_slice %arg2[%38, %c0_i32_21] : memref<520x128xf32, #tpu.memory_space<vmem>> -> memref<1x128xf32, #tpu.memory_space<vmem>>
    %c5_i32_22 = arith.constant 5 : i32
    %c0_i32_23 = arith.constant 0 : i32
    %40 = tpu.memref_slice %arg3[%c5_i32_22, %c0_i32_23] : memref<8x128xf32, #tpu.memory_space<vmem>> -> memref<1x128xf32, #tpu.memory_space<vmem>>
    %41 = tpu.memref_slice %arg4[%c5_i32_20] : memref<16x!tpu.dma_semaphore, #tpu.memory_space<semaphore_mem>> -> memref<1x!tpu.dma_semaphore, #tpu.memory_space<semaphore_mem>>
    %42 = tpu.memref_squeeze %41 : memref<1x!tpu.dma_semaphore, #tpu.memory_space<semaphore_mem>> -> memref<!tpu.dma_semaphore, #tpu.memory_space<semaphore_mem>>
    tpu.enqueue_dma source(%39 : memref<1x128xf32, #tpu.memory_space<vmem>>) target(%40 : memref<1x128xf32, #tpu.memory_space<vmem>>) target_semaphore(%42 : memref<!tpu.dma_semaphore, #tpu.memory_space<semaphore_mem>>)
    %c6_i32 = arith.constant 6 : i32
    %43 = arith.addi %0, %c6_i32 : i32
    %44 = arith.index_cast %43 : i32 to index
    %45 = memref.load %arg1[%44] : memref<16xi32, #tpu.memory_space<smem>>
    %c6_i32_24 = arith.constant 6 : i32
    %c0_i32_25 = arith.constant 0 : i32
    %46 = tpu.memref_slice %arg2[%45, %c0_i32_25] : memref<520x128xf32, #tpu.memory_space<vmem>> -> memref<1x128xf32, #tpu.memory_space<vmem>>
    %c6_i32_26 = arith.constant 6 : i32
    %c0_i32_27 = arith.constant 0 : i32
    %47 = tpu.memref_slice %arg3[%c6_i32_26, %c0_i32_27] : memref<8x128xf32, #tpu.memory_space<vmem>> -> memref<1x128xf32, #tpu.memory_space<vmem>>
    %48 = tpu.memref_slice %arg4[%c6_i32_24] : memref<16x!tpu.dma_semaphore, #tpu.memory_space<semaphore_mem>> -> memref<1x!tpu.dma_semaphore, #tpu.memory_space<semaphore_mem>>
    %49 = tpu.memref_squeeze %48 : memref<1x!tpu.dma_semaphore, #tpu.memory_space<semaphore_mem>> -> memref<!tpu.dma_semaphore, #tpu.memory_space<semaphore_mem>>
    tpu.enqueue_dma source(%46 : memref<1x128xf32, #tpu.memory_space<vmem>>) target(%47 : memref<1x128xf32, #tpu.memory_space<vmem>>) target_semaphore(%49 : memref<!tpu.dma_semaphore, #tpu.memory_space<semaphore_mem>>)
    %c7_i32 = arith.constant 7 : i32
    %50 = arith.addi %0, %c7_i32 : i32
    %51 = arith.index_cast %50 : i32 to index
    %52 = memref.load %arg1[%51] : memref<16xi32, #tpu.memory_space<smem>>
    %c7_i32_28 = arith.constant 7 : i32
    %c0_i32_29 = arith.constant 0 : i32
    %53 = tpu.memref_slice %arg2[%52, %c0_i32_29] : memref<520x128xf32, #tpu.memory_space<vmem>> -> memref<1x128xf32, #tpu.memory_space<vmem>>
    %c7_i32_30 = arith.constant 7 : i32
    %c0_i32_31 = arith.constant 0 : i32
    %54 = tpu.memref_slice %arg3[%c7_i32_30, %c0_i32_31] : memref<8x128xf32, #tpu.memory_space<vmem>> -> memref<1x128xf32, #tpu.memory_space<vmem>>
    %55 = tpu.memref_slice %arg4[%c7_i32_28] : memref<16x!tpu.dma_semaphore, #tpu.memory_space<semaphore_mem>> -> memref<1x!tpu.dma_semaphore, #tpu.memory_space<semaphore_mem>>
    %56 = tpu.memref_squeeze %55 : memref<1x!tpu.dma_semaphore, #tpu.memory_space<semaphore_mem>> -> memref<!tpu.dma_semaphore, #tpu.memory_space<semaphore_mem>>
    tpu.enqueue_dma source(%53 : memref<1x128xf32, #tpu.memory_space<vmem>>) target(%54 : memref<1x128xf32, #tpu.memory_space<vmem>>) target_semaphore(%56 : memref<!tpu.dma_semaphore, #tpu.memory_space<semaphore_mem>>)
    %c0_i32_32 = arith.constant 0 : i32
    %c8_i32_33 = arith.constant 8 : i32
    %57 = arith.addi %c0_i32_32, %c8_i32_33 : i32
    %c1_i32_34 = arith.constant 1 : i32
    scf.for %arg5 = %c0_i32_32 to %57 step %c1_i32_34  : i32 {
      %c16_i32 = arith.constant 16 : i32
      %c0_i32_36 = arith.constant 0 : i32
      %58 = arith.cmpi eq, %c16_i32, %c0_i32_36 : i32
      %c1_i32_37 = arith.constant 1 : i32
      %59 = arith.select %58, %c1_i32_37, %c16_i32 : i32
      %60 = arith.remsi %arg5, %59 : i32
      %c0_i32_38 = arith.constant 0 : i32
      %61 = arith.cmpi ne, %60, %c0_i32_38 : i32
      %c0_i32_39 = arith.constant 0 : i32
      %62 = arith.cmpi slt, %60, %c0_i32_39 : i32
      %c0_i32_40 = arith.constant 0 : i32
      %63 = arith.cmpi slt, %59, %c0_i32_40 : i32
      %64 = arith.xori %62, %63 : i1
      %65 = arith.andi %64, %61 : i1
      %66 = arith.addi %60, %59 : i32
      %67 = arith.select %65, %66, %60 : i32
      %c0_i32_41 = arith.constant 0 : i32
      %c0_i32_42 = arith.constant 0 : i32
      %68 = tpu.memref_slice %arg2[%c0_i32_41, %c0_i32_42] : memref<520x128xf32, #tpu.memory_space<vmem>> -> memref<1x128xf32, #tpu.memory_space<vmem>>
      %c0_i32_43 = arith.constant 0 : i32
      %c0_i32_44 = arith.constant 0 : i32
      %69 = tpu.memref_slice %arg3[%c0_i32_43, %c0_i32_44] : memref<8x128xf32, #tpu.memory_space<vmem>> -> memref<1x128xf32, #tpu.memory_space<vmem>>
      %70 = tpu.memref_slice %arg4[%67] : memref<16x!tpu.dma_semaphore, #tpu.memory_space<semaphore_mem>> -> memref<1x!tpu.dma_semaphore, #tpu.memory_space<semaphore_mem>>
      %71 = tpu.memref_squeeze %70 : memref<1x!tpu.dma_semaphore, #tpu.memory_space<semaphore_mem>> -> memref<!tpu.dma_semaphore, #tpu.memory_space<semaphore_mem>>
      tpu.wait_dma2 semaphore(%71 : memref<!tpu.dma_semaphore, #tpu.memory_space<semaphore_mem>>) src(%68 : memref<1x128xf32, #tpu.memory_space<vmem>>) dst(%69 : memref<1x128xf32, #tpu.memory_space<vmem>>)
      %c16_i32_45 = arith.constant 16 : i32
      %72 = arith.addi %arg5, %c16_i32_45 : i32
      %c8_i32_46 = arith.constant 8 : i32
      %73 = arith.cmpi slt, %72, %c8_i32_46 : i32
      %74 = arith.extui %73 : i1 to i32
      %c0_i32_47 = arith.constant 0 : i32
      %75 = arith.cmpi ne, %74, %c0_i32_47 : i32
      scf.if %75 {
        %c16_i32_48 = arith.constant 16 : i32
        %76 = arith.addi %arg5, %c16_i32_48 : i32
        %77 = arith.addi %0, %76 : i32
        %78 = arith.index_cast %77 : i32 to index
        %79 = memref.load %arg1[%78] : memref<16xi32, #tpu.memory_space<smem>>
        %c16_i32_49 = arith.constant 16 : i32
        %c0_i32_50 = arith.constant 0 : i32
        %80 = arith.cmpi eq, %c16_i32_49, %c0_i32_50 : i32
        %c1_i32_51 = arith.constant 1 : i32
        %81 = arith.select %80, %c1_i32_51, %c16_i32_49 : i32
        %82 = arith.remsi %76, %81 : i32
        %c0_i32_52 = arith.constant 0 : i32
        %83 = arith.cmpi ne, %82, %c0_i32_52 : i32
        %c0_i32_53 = arith.constant 0 : i32
        %84 = arith.cmpi slt, %82, %c0_i32_53 : i32
        %c0_i32_54 = arith.constant 0 : i32
        %85 = arith.cmpi slt, %81, %c0_i32_54 : i32
        %86 = arith.xori %84, %85 : i1
        %87 = arith.andi %86, %83 : i1
        %88 = arith.addi %82, %81 : i32
        %89 = arith.select %87, %88, %82 : i32
        %c0_i32_55 = arith.constant 0 : i32
        %90 = tpu.memref_slice %arg2[%79, %c0_i32_55] : memref<520x128xf32, #tpu.memory_space<vmem>> -> memref<1x128xf32, #tpu.memory_space<vmem>>
        %c0_i32_56 = arith.constant 0 : i32
        %91 = tpu.memref_slice %arg3[%76, %c0_i32_56] : memref<8x128xf32, #tpu.memory_space<vmem>> -> memref<1x128xf32, #tpu.memory_space<vmem>>
        %92 = tpu.memref_slice %arg4[%89] : memref<16x!tpu.dma_semaphore, #tpu.memory_space<semaphore_mem>> -> memref<1x!tpu.dma_semaphore, #tpu.memory_space<semaphore_mem>>
        %93 = tpu.memref_squeeze %92 : memref<1x!tpu.dma_semaphore, #tpu.memory_space<semaphore_mem>> -> memref<!tpu.dma_semaphore, #tpu.memory_space<semaphore_mem>>
        tpu.enqueue_dma source(%90 : memref<1x128xf32, #tpu.memory_space<vmem>>) target(%91 : memref<1x128xf32, #tpu.memory_space<vmem>>) target_semaphore(%93 : memref<!tpu.dma_semaphore, #tpu.memory_space<semaphore_mem>>)
      } else {
      }
    }
    %c8_i32_35 = arith.constant 8 : i32
    return
  }
  func.func @transform_0(%arg0: i32, %arg1: memref<16xi32, #tpu.memory_space<smem>>) -> (i32, i32) {
    %c0_i32 = arith.constant 0 : i32
    %c0_i32_0 = arith.constant 0 : i32
    %c0_i32_1 = arith.constant 0 : i32
    return %c0_i32, %c0_i32_0 : i32, i32
  }
  func.func @transform_1(%arg0: i32, %arg1: memref<16xi32, #tpu.memory_space<smem>>) -> (i32, i32) {
    %c0_i32 = arith.constant 0 : i32
    %c0_i32_0 = arith.constant 0 : i32
    return %arg0, %c0_i32 : i32, i32
  }
}

</mosaic_0001>

<llo_original>
// kernel: tpu_custom_call.1
$region0: #{tpu_custom_call.1}
  #allocation0 [shape = 'u32[]', space=smem, size = 0x4, offset = 0x4, fixed_abs, tag = 'smem constant byte address 0x4 - core index']
  #allocation1 [shape = 'u32[144,128]{1,0:T(1,128)}', space=vmem, size = 0x12000, scoped, tag = 'internal scratch']
  #allocation2 [shape = 's32[16]{0}', space=sflag, size = 0x40, scoped, tag = 'scratch operand']
  #allocation3 [shape = 's32[1]{0}', space=sflag, size = 0x4, scoped, tag = 'scoped memory for tpu_custom_call.1']
  #allocation4 [shape = 'u8[512]{0}', space=smem, size = 0x200, scoped, tag = 'prefetched SMEM operand 0']
  #allocation9 [shape = 's32[]', space=sflag, size = 0x4, offset = 0, fixed_abs, tag = 'sflag constant byte address 0x0 - dummy sync flag']
  #allocation10 [shape = 's32[]', space=sflag, size = 0x4, offset = 0, fixed_abs, tag = 'sflag constant byte address 0x0 - dummy sync flag']
  #allocation11 [shape = 's32[]', space=sflag, size = 0x4, offset = 0, fixed_abs, tag = 'sflag constant byte address 0x0 - dummy sync flag']
  #allocation12 [shape = 's32[]', space=sflag, size = 0x4, offset = 0, fixed_abs, tag = 'sflag constant byte address 0x0 - dummy sync flag']
  #allocation13 [shape = 's32[]', space=sflag, size = 0x4, offset = 0, fixed_abs, tag = 'sflag constant byte address 0x0 - dummy sync flag']
  #allocation14 [shape = 's32[]', space=sflag, size = 0x4, offset = 0, fixed_abs, tag = 'sflag constant byte address 0x0 - dummy sync flag']
  #allocation15 [shape = 's32[]', space=sflag, size = 0x4, offset = 0, fixed_abs, tag = 'sflag constant byte address 0x0 - dummy sync flag']
  #allocation16 [shape = 's32[]', space=sflag, size = 0x4, offset = 0, fixed_abs, tag = 'sflag constant byte address 0x0 - dummy sync flag']
  #allocation17 [shape = 's32[]', space=sflag, size = 0x4, offset = 0, fixed_abs, tag = 'sflag constant byte address 0x0 - dummy sync flag']
  %s0 = inlined_call_operand.hbm [shape: s32[16], index: 0, kind: input, shape index: {}]
  %s1 = inlined_call_operand.hbm [shape: f32[520,128], index: 1, kind: input, shape index: {}]
  %s2 = inlined_call_operand.hbm [shape: f32[16,128], index: 2, kind: output, shape index: {}]
  %s3 = sld [smem:[#allocation0]]
  $region322: #{tpu_custom_call.1} parent=0
    _
  %s5 = ssub.s32 1, %s3
  %s6 = scalar_select 0, %s5, %s3
  %8 = dma.hbm_to_smem %s0, 16, [#allocation4], [#allocation3]
  %9 = dma.done [#allocation3], 16
  %10 = sfence
  $region1: #{tpu_custom_call.1} parent=0
    #allocation5 [shape = 'u8[266240]{0}', space=vmem, size = 0x41000, scoped, tag = 'input window, operand 1, single buffered']
    #allocation6 [shape = 's32[2]{0}', space=sflag, size = 0x8, scoped, tag = 'scoped memory for tpu_custom_call.1']
    #allocation7 [shape = 's32[2]{0}', space=sflag, size = 0x8, scoped, tag = 'scoped memory for tpu_custom_call.1']
    #allocation8 [shape = 'u8[8192]{0}', space=vmem, size = 0x2000, scoped, tag = 'output window, operand 0']
    %11 = vsyncpa [#allocation6], 0
    %12 = vsyncpa [#allocation7], 0
    %s13 = scalar_lea.sflag [#allocation7], 1
    %14 = vsyncpa %s13, 0
    loop: start=0, step=1, limit=4
    $region2: #{tpu_custom_call.1} parent=1 // loop_pre_header
      _
    $region3: #{tpu_custom_call.1} parent=1 // loop_header
      %s16 = sphi 0, %s20
      %p17 = scmp.ge.s32.totalorder %s16, 4
      %s24 = sphi 0, %s24
      %s26 = sphi 0, %s24
      %s27 = sphi 0, %s26
      %s41 = sphi 0, %s27
      %s47 = sphi 0, %s49
      %s50 = sphi 0, %s47
      %s51 = sphi 0, %s50
      %s67 = sphi 0, %s51
    $region4: #{tpu_custom_call.1} parent=1 // loop_header_branch
      %19 = sbr.rel (%p17) target = $region8
    $region5: #{tpu_custom_call.1} parent=1 // loop_body
      %s21 = ssub.s32 %s16, 1
      %s22 = ssub.s32 %s16, 2
      %s23 = sadd.s32 %s16, 1
      %s25 = sadd.s32 %s24, 1
      %p28 = scmp.eq.s32.totalorder %s16, 1
      %p29 = scmp.ne.s32.totalorder %s24, %s26
      %p30 = scmp.eq.s32.totalorder %s16, 0
      %p31 = por %p29, %p30
      %p32 = scmp.ne.s32.totalorder %s24, %s26
      %p33 = scmp.eq.s32.totalorder %s21, 1
      %p34 = por %p32, %p33
      %p35 = scmp.ne.s32.totalorder %s26, %s27
      %p36 = scmp.eq.s32.totalorder %s21, 0
      %p37 = por %p35, %p36
      %p38 = scmp.ne.s32.totalorder %s26, %s27
      %p39 = scmp.eq.s32.totalorder %s22, 1
      %p40 = por %p38, %p39
      %p42 = scmp.ne.s32.totalorder %s27, %s41
      %p43 = scmp.eq.s32.totalorder %s22, 0
      %p44 = por %p42, %p43
      %s45 = ssub.s32 %s16, %s23
      %p46 = scmp.eq.s32.totalorder %s45, 0
      %s48 = sadd.s32 %s47, 1
      %s49 = scalar_select %p46, %s47, %s48
      %p52 = pneg %p46
      %p53 = scmp.eq.s32.totalorder %s16, 1
      %p54 = por %p52, %p53
      %p55 = scmp.ne.s32.totalorder %s47, %s50
      %p56 = scmp.eq.s32.totalorder %s16, 0
      %p57 = por %p55, %p56
      %p58 = scmp.ne.s32.totalorder %s47, %s50
      %p59 = scmp.eq.s32.totalorder %s21, 1
      %p60 = por %p58, %p59
      %p61 = scmp.ne.s32.totalorder %s50, %s51
      %p62 = scmp.eq.s32.totalorder %s21, 0
      %p63 = por %p61, %p62
      %p64 = scmp.ne.s32.totalorder %s50, %s51
      %p65 = scmp.eq.s32.totalorder %s22, 1
      %p66 = por %p64, %p65
      %p68 = scmp.ne.s32.totalorder %s51, %s67
      %p69 = scmp.eq.s32.totalorder %s22, 0
      %p70 = por %p68, %p69
      %p71 = scmp.le.s32.totalorder 1, %s16
      %p72 = scmp.lt.s32.totalorder %s16, 3
      %p73 = pnand %p71, %p72
      %p74 = pneg %p73
      // Predicated region
      $region9: #{tpu_custom_call.1} parent=5 // pred_check
        _
      $region10: #{tpu_custom_call.1} parent=5 // pred_check_branch
        %76 = sbr.rel (%p73) target = $region12
      $region11: #{tpu_custom_call.1} parent=5 // pred_region
        %s77 = ssub.s32 %s16, 1
        // Predicated region
        $region13: #{tpu_custom_call.1} parent=11 // pred_check
          %p78 = pneg %p37
        $region14: #{tpu_custom_call.1} parent=11 // pred_check_branch
          %80 = sbr.rel (%p78) target = $region16
        $region15: #{tpu_custom_call.1} parent=11 // pred_region
          %s82 = ssub.s32 8320, 8320
          %83 = vsyncadd [#allocation6], %s82
          %s84 = sshll.u32 [#allocation5], 4
          %s85 = int_to_ptr.vmem [resolvable:$true] %s84
          %90 = dma.hbm_to_vmem [thread:$0]  %s1, 8320, %s85, [#allocation6], 128, 128, 8
        $region16: #{tpu_custom_call.1} parent=11 // pred_fallthru
          _
      $region12: #{tpu_custom_call.1} parent=5 // pred_fallthru
        _
      %p91 = scmp.lt.s32.totalorder %s16, 2
      // Predicated region
      $region17: #{tpu_custom_call.1} parent=5 // pred_check
        %p92 = pneg %p91
      $region18: #{tpu_custom_call.1} parent=5 // pred_check_branch
        %94 = sbr.rel (%p92) target = $region20
      $region19: #{tpu_custom_call.1} parent=5 // pred_region
        _
      $region20: #{tpu_custom_call.1} parent=5 // pred_fallthru
        _
      %p95 = scmp.le.s32.totalorder 1, %s16
      %p96 = scmp.lt.s32.totalorder %s16, 3
      %p97 = pnand %p95, %p96
      %p98 = pneg %p97
      // Predicated region
      $region21: #{tpu_custom_call.1} parent=5 // pred_check
        _
      $region22: #{tpu_custom_call.1} parent=5 // pred_check_branch
        %100 = sbr.rel (%p97) target = $region24
      $region23: #{tpu_custom_call.1} parent=5 // pred_region
        %s101 = ssub.s32 %s16, 1
        // Predicated region
        $region25: #{tpu_custom_call.1} parent=23 // pred_check
          %p102 = pneg %p37
        $region26: #{tpu_custom_call.1} parent=23 // pred_check_branch
          %104 = sbr.rel (%p102) target = $region28
        $region27: #{tpu_custom_call.1} parent=23 // pred_region
          %105 = dma.done [#allocation6], 8320
        $region28: #{tpu_custom_call.1} parent=23 // pred_fallthru
          _
        %p106 = pneg %p37
        %p107 = pneg %p34
        %p108 = pneg %p63
        %p109 = pneg %p60
        %s110 = sand.u32 %s50, 1
        %s111 = scalar_lea.sflag [#allocation7], %s110
        %s112 = sand.u32 %s50, 1
        %s113 = smul.addr %s112, 8
        %s114 = scalar_lea.vmem [#allocation8], %s113
        %s115 = smul.u32 %s21, 8
        %s116 = sld [smem:[#allocation4 + %s115]]
        %s117 = scalar_lea.vmem [#allocation5], %s116
        %p119 = scmp.lt.u32.totalorder 1, 8
        %p120 = pneg %p119
        // Predicated region
        $region29: #{tpu_custom_call.1} parent=23 // pred_check
          _
        $region30: #{tpu_custom_call.1} parent=23 // pred_check_branch
          %122 = sbr.rel (%p119) target = $region32
        $region31: #{tpu_custom_call.1} parent=23 // pred_region
          %s137 = sand.u32 1, 7
          %p138 = scmp.eq.s32.totalorder %s137, 0
          %p139 = pneg %p138
          // Predicated region
          $region44: #{tpu_custom_call.1} parent=31 // pred_check
            _
          $region45: #{tpu_custom_call.1} parent=31 // pred_check_branch
            %141 = sbr.rel (%p138) target = $region47
          $region46: #{tpu_custom_call.1} parent=31 // pred_region
            %s142 = sand.u32 1, 7
            %s143 = ssub.s32 1, %s142
            %s144 = scalar_lea.vmem %s117, %s143 [#allocation5]
            %s145 = ssub.s32 1, %s142
            %s146 = scalar_lea.vmem %s114, %s145 [#allocation8]
            %s147 = sshllo.u32 0, %s142
            loop: start=0, step=1, limit=1
            $region48: #{tpu_custom_call.1} parent=46 // loop_pre_header
              _
            $region49: #{tpu_custom_call.1} parent=46 // loop_header
              %s149 = sphi 0, %s153
              %p150 = scmp.ge.s32.totalorder %s149, 1
              %s154 = sphi %s144, %s144
              %s155 = sphi %s146, %s146
            $region50: #{tpu_custom_call.1} parent=46 // loop_header_branch
              %152 = sbr.rel (%p150) target = $region54
            $region51: #{tpu_custom_call.1} parent=46 // loop_body
              %v156 = vld [vmem:[%s154] sm:%s147]
              %157 = vst [vmem:[%s155] sm:%s147] %v156
            $region52: #{tpu_custom_call.1} parent=46 // loop_footer
              %s153 = sadd.s32 1, %s149
            $region53: #{tpu_custom_call.1} parent=46 // loop_footer_branch
              %148 = sbr.rel target = $region49
            $region54: #{tpu_custom_call.1} parent=46 // loop_exit
              _
          $region47: #{tpu_custom_call.1} parent=31 // pred_fallthru
            _
        $region32: #{tpu_custom_call.1} parent=23 // pred_fallthru
          _
        // Predicated region
        $region33: #{tpu_custom_call.1} parent=23 // pred_check
          %p123 = pneg %p119
        $region34: #{tpu_custom_call.1} parent=23 // pred_check_branch
          %125 = sbr.rel (%p123) target = $region36
        $region35: #{tpu_custom_call.1} parent=23 // pred_region
          %s126 = sshllo.u32 0, 1
          loop: start=0, step=1, limit=1
          $region37: #{tpu_custom_call.1} parent=35 // loop_pre_header
            _
          $region38: #{tpu_custom_call.1} parent=35 // loop_header
            %s128 = sphi 0, %s132
            %p129 = scmp.ge.s32.totalorder %s128, 1
            %s133 = sphi %s117, %s117
            %s134 = sphi %s114, %s114
          $region39: #{tpu_custom_call.1} parent=35 // loop_header_branch
            %131 = sbr.rel (%p129) target = $region43
          $region40: #{tpu_custom_call.1} parent=35 // loop_body
            %v135 = vld [vmem:[%s133] sm:%s126]
            %136 = vst [vmem:[%s134] sm:%s126] %v135
          $region41: #{tpu_custom_call.1} parent=35 // loop_footer
            %s132 = sadd.s32 1, %s128
          $region42: #{tpu_custom_call.1} parent=35 // loop_footer_branch
            %127 = sbr.rel target = $region38
          $region43: #{tpu_custom_call.1} parent=35 // loop_exit
            _
        $region36: #{tpu_custom_call.1} parent=23 // pred_fallthru
          _
        // Predicated region
        $region55: #{tpu_custom_call.1} parent=23 // pred_check
          _
        $region56: #{tpu_custom_call.1} parent=23 // pred_check_branch
          %160 = sbr.rel (0) target = $region58
        $region57: #{tpu_custom_call.1} parent=23 // pred_region
          %161 = vsyncadd [#allocation2], 16
        $region58: #{tpu_custom_call.1} parent=23 // pred_fallthru
          _
        %s162 = sadd.s32 %s115, 1
        %s163 = sld [smem:[#allocation4 + %s162]]
        %s164 = scalar_lea.vmem [#allocation5], %s163
        %s165 = scalar_lea.vmem %s114, 1 [#allocation8]
        %s166 = scalar_lea.sflag [#allocation2], 1
        %p168 = scmp.lt.u32.totalorder 1, 8
        %p169 = pneg %p168
        // Predicated region
        $region59: #{tpu_custom_call.1} parent=23 // pred_check
          _
        $region60: #{tpu_custom_call.1} parent=23 // pred_check_branch
          %171 = sbr.rel (%p168) target = $region62
        $region61: #{tpu_custom_call.1} parent=23 // pred_region
          %s186 = sand.u32 1, 7
          %p187 = scmp.eq.s32.totalorder %s186, 0
          %p188 = pneg %p187
          // Predicated region
          $region74: #{tpu_custom_call.1} parent=61 // pred_check
            _
          $region75: #{tpu_custom_call.1} parent=61 // pred_check_branch
            %190 = sbr.rel (%p187) target = $region77
          $region76: #{tpu_custom_call.1} parent=61 // pred_region
            %s191 = sand.u32 1, 7
            %s192 = ssub.s32 1, %s191
            %s193 = scalar_lea.vmem %s164, %s192 [#allocation5]
            %s194 = ssub.s32 1, %s191
            %s195 = scalar_lea.vmem %s165, %s194 [#allocation8]
            %s196 = sshllo.u32 0, %s191
            loop: start=0, step=1, limit=1
            $region78: #{tpu_custom_call.1} parent=76 // loop_pre_header
              _
            $region79: #{tpu_custom_call.1} parent=76 // loop_header
              %s198 = sphi 0, %s202
              %p199 = scmp.ge.s32.totalorder %s198, 1
              %s203 = sphi %s193, %s193
              %s204 = sphi %s195, %s195
            $region80: #{tpu_custom_call.1} parent=76 // loop_header_branch
              %201 = sbr.rel (%p199) target = $region84
            $region81: #{tpu_custom_call.1} parent=76 // loop_body
              %v205 = vld [vmem:[%s203] sm:%s196]
              %206 = vst [vmem:[%s204] sm:%s196] %v205
            $region82: #{tpu_custom_call.1} parent=76 // loop_footer
              %s202 = sadd.s32 1, %s198
            $region83: #{tpu_custom_call.1} parent=76 // loop_footer_branch
              %197 = sbr.rel target = $region79
            $region84: #{tpu_custom_call.1} parent=76 // loop_exit
              _
          $region77: #{tpu_custom_call.1} parent=61 // pred_fallthru
            _
        $region62: #{tpu_custom_call.1} parent=23 // pred_fallthru
          _
        // Predicated region
        $region63: #{tpu_custom_call.1} parent=23 // pred_check
          %p172 = pneg %p168
        $region64: #{tpu_custom_call.1} parent=23 // pred_check_branch
          %174 = sbr.rel (%p172) target = $region66
        $region65: #{tpu_custom_call.1} parent=23 // pred_region
          %s175 = sshllo.u32 0, 1
          loop: start=0, step=1, limit=1
          $region67: #{tpu_custom_call.1} parent=65 // loop_pre_header
            _
          $region68: #{tpu_custom_call.1} parent=65 // loop_header
            %s177 = sphi 0, %s181
            %p178 = scmp.ge.s32.totalorder %s177, 1
            %s182 = sphi %s164, %s164
            %s183 = sphi %s165, %s165
          $region69: #{tpu_custom_call.1} parent=65 // loop_header_branch
            %180 = sbr.rel (%p178) target = $region73
          $region70: #{tpu_custom_call.1} parent=65 // loop_body
            %v184 = vld [vmem:[%s182] sm:%s175]
            %185 = vst [vmem:[%s183] sm:%s175] %v184
          $region71: #{tpu_custom_call.1} parent=65 // loop_footer
            %s181 = sadd.s32 1, %s177
          $region72: #{tpu_custom_call.1} parent=65 // loop_footer_branch
            %176 = sbr.rel target = $region68
          $region73: #{tpu_custom_call.1} parent=65 // loop_exit
            _
        $region66: #{tpu_custom_call.1} parent=23 // pred_fallthru
          _
        // Predicated region
        $region85: #{tpu_custom_call.1} parent=23 // pred_check
          _
        $region86: #{tpu_custom_call.1} parent=23 // pred_check_branch
          %209 = sbr.rel (0) target = $region88
        $region87: #{tpu_custom_call.1} parent=23 // pred_region
          %210 = vsyncadd %s166, 16
        $region88: #{tpu_custom_call.1} parent=23 // pred_fallthru
          _
        %s211 = sadd.s32 %s115, 2
        %s212 = sld [smem:[#allocation4 + %s211]]
        %s213 = scalar_lea.vmem [#allocation5], %s212
        %s214 = scalar_lea.vmem %s114, 2 [#allocation8]
        %s215 = scalar_lea.sflag [#allocation2], 2
        %p217 = scmp.lt.u32.totalorder 1, 8
        %p218 = pneg %p217
        // Predicated region
        $region89: #{tpu_custom_call.1} parent=23 // pred_check
          _
        $region90: #{tpu_custom_call.1} parent=23 // pred_check_branch
          %220 = sbr.rel (%p217) target = $region92
        $region91: #{tpu_custom_call.1} parent=23 // pred_region
          %s235 = sand.u32 1, 7
          %p236 = scmp.eq.s32.totalorder %s235, 0
          %p237 = pneg %p236
          // Predicated region
          $region104: #{tpu_custom_call.1} parent=91 // pred_check
            _
          $region105: #{tpu_custom_call.1} parent=91 // pred_check_branch
            %239 = sbr.rel (%p236) target = $region107
          $region106: #{tpu_custom_call.1} parent=91 // pred_region
            %s240 = sand.u32 1, 7
            %s241 = ssub.s32 1, %s240
            %s242 = scalar_lea.vmem %s213, %s241 [#allocation5]
            %s243 = ssub.s32 1, %s240
            %s244 = scalar_lea.vmem %s214, %s243 [#allocation8]
            %s245 = sshllo.u32 0, %s240
            loop: start=0, step=1, limit=1
            $region108: #{tpu_custom_call.1} parent=106 // loop_pre_header
              _
            $region109: #{tpu_custom_call.1} parent=106 // loop_header
              %s247 = sphi 0, %s251
              %p248 = scmp.ge.s32.totalorder %s247, 1
              %s252 = sphi %s242, %s242
              %s253 = sphi %s244, %s244
            $region110: #{tpu_custom_call.1} parent=106 // loop_header_branch
              %250 = sbr.rel (%p248) target = $region114
            $region111: #{tpu_custom_call.1} parent=106 // loop_body
              %v254 = vld [vmem:[%s252] sm:%s245]
              %255 = vst [vmem:[%s253] sm:%s245] %v254
            $region112: #{tpu_custom_call.1} parent=106 // loop_footer
              %s251 = sadd.s32 1, %s247
            $region113: #{tpu_custom_call.1} parent=106 // loop_footer_branch
              %246 = sbr.rel target = $region109
            $region114: #{tpu_custom_call.1} parent=106 // loop_exit
              _
          $region107: #{tpu_custom_call.1} parent=91 // pred_fallthru
            _
        $region92: #{tpu_custom_call.1} parent=23 // pred_fallthru
          _
        // Predicated region
        $region93: #{tpu_custom_call.1} parent=23 // pred_check
          %p221 = pneg %p217
        $region94: #{tpu_custom_call.1} parent=23 // pred_check_branch
          %223 = sbr.rel (%p221) target = $region96
        $region95: #{tpu_custom_call.1} parent=23 // pred_region
          %s224 = sshllo.u32 0, 1
          loop: start=0, step=1, limit=1
          $region97: #{tpu_custom_call.1} parent=95 // loop_pre_header
            _
          $region98: #{tpu_custom_call.1} parent=95 // loop_header
            %s226 = sphi 0, %s230
            %p227 = scmp.ge.s32.totalorder %s226, 1
            %s231 = sphi %s213, %s213
            %s232 = sphi %s214, %s214
          $region99: #{tpu_custom_call.1} parent=95 // loop_header_branch
            %229 = sbr.rel (%p227) target = $region103
          $region100: #{tpu_custom_call.1} parent=95 // loop_body
            %v233 = vld [vmem:[%s231] sm:%s224]
            %234 = vst [vmem:[%s232] sm:%s224] %v233
          $region101: #{tpu_custom_call.1} parent=95 // loop_footer
            %s230 = sadd.s32 1, %s226
          $region102: #{tpu_custom_call.1} parent=95 // loop_footer_branch
            %225 = sbr.rel target = $region98
          $region103: #{tpu_custom_call.1} parent=95 // loop_exit
            _
        $region96: #{tpu_custom_call.1} parent=23 // pred_fallthru
          _
        // Predicated region
        $region115: #{tpu_custom_call.1} parent=23 // pred_check
          _
        $region116: #{tpu_custom_call.1} parent=23 // pred_check_branch
          %258 = sbr.rel (0) target = $region118
        $region117: #{tpu_custom_call.1} parent=23 // pred_region
          %259 = vsyncadd %s215, 16
        $region118: #{tpu_custom_call.1} parent=23 // pred_fallthru
          _
        %s260 = sadd.s32 %s115, 3
        %s261 = sld [smem:[#allocation4 + %s260]]
        %s262 = scalar_lea.vmem [#allocation5], %s261
        %s263 = scalar_lea.vmem %s114, 3 [#allocation8]
        %s264 = scalar_lea.sflag [#allocation2], 3
        %p266 = scmp.lt.u32.totalorder 1, 8
        %p267 = pneg %p266
        // Predicated region
        $region119: #{tpu_custom_call.1} parent=23 // pred_check
          _
        $region120: #{tpu_custom_call.1} parent=23 // pred_check_branch
          %269 = sbr.rel (%p266) target = $region122
        $region121: #{tpu_custom_call.1} parent=23 // pred_region
          %s284 = sand.u32 1, 7
          %p285 = scmp.eq.s32.totalorder %s284, 0
          %p286 = pneg %p285
          // Predicated region
          $region134: #{tpu_custom_call.1} parent=121 // pred_check
            _
          $region135: #{tpu_custom_call.1} parent=121 // pred_check_branch
            %288 = sbr.rel (%p285) target = $region137
          $region136: #{tpu_custom_call.1} parent=121 // pred_region
            %s289 = sand.u32 1, 7
            %s290 = ssub.s32 1, %s289
            %s291 = scalar_lea.vmem %s262, %s290 [#allocation5]
            %s292 = ssub.s32 1, %s289
            %s293 = scalar_lea.vmem %s263, %s292 [#allocation8]
            %s294 = sshllo.u32 0, %s289
            loop: start=0, step=1, limit=1
            $region138: #{tpu_custom_call.1} parent=136 // loop_pre_header
              _
            $region139: #{tpu_custom_call.1} parent=136 // loop_header
              %s296 = sphi 0, %s300
              %p297 = scmp.ge.s32.totalorder %s296, 1
              %s301 = sphi %s291, %s291
              %s302 = sphi %s293, %s293
            $region140: #{tpu_custom_call.1} parent=136 // loop_header_branch
              %299 = sbr.rel (%p297) target = $region144
            $region141: #{tpu_custom_call.1} parent=136 // loop_body
              %v303 = vld [vmem:[%s301] sm:%s294]
              %304 = vst [vmem:[%s302] sm:%s294] %v303
            $region142: #{tpu_custom_call.1} parent=136 // loop_footer
              %s300 = sadd.s32 1, %s296
            $region143: #{tpu_custom_call.1} parent=136 // loop_footer_branch
              %295 = sbr.rel target = $region139
            $region144: #{tpu_custom_call.1} parent=136 // loop_exit
              _
          $region137: #{tpu_custom_call.1} parent=121 // pred_fallthru
            _
        $region122: #{tpu_custom_call.1} parent=23 // pred_fallthru
          _
        // Predicated region
        $region123: #{tpu_custom_call.1} parent=23 // pred_check
          %p270 = pneg %p266
        $region124: #{tpu_custom_call.1} parent=23 // pred_check_branch
          %272 = sbr.rel (%p270) target = $region126
        $region125: #{tpu_custom_call.1} parent=23 // pred_region
          %s273 = sshllo.u32 0, 1
          loop: start=0, step=1, limit=1
          $region127: #{tpu_custom_call.1} parent=125 // loop_pre_header
            _
          $region128: #{tpu_custom_call.1} parent=125 // loop_header
            %s275 = sphi 0, %s279
            %p276 = scmp.ge.s32.totalorder %s275, 1
            %s280 = sphi %s262, %s262
            %s281 = sphi %s263, %s263
          $region129: #{tpu_custom_call.1} parent=125 // loop_header_branch
            %278 = sbr.rel (%p276) target = $region133
          $region130: #{tpu_custom_call.1} parent=125 // loop_body
            %v282 = vld [vmem:[%s280] sm:%s273]
            %283 = vst [vmem:[%s281] sm:%s273] %v282
          $region131: #{tpu_custom_call.1} parent=125 // loop_footer
            %s279 = sadd.s32 1, %s275
          $region132: #{tpu_custom_call.1} parent=125 // loop_footer_branch
            %274 = sbr.rel target = $region128
          $region133: #{tpu_custom_call.1} parent=125 // loop_exit
            _
        $region126: #{tpu_custom_call.1} parent=23 // pred_fallthru
          _
        // Predicated region
        $region145: #{tpu_custom_call.1} parent=23 // pred_check
          _
        $region146: #{tpu_custom_call.1} parent=23 // pred_check_branch
          %307 = sbr.rel (0) target = $region148
        $region147: #{tpu_custom_call.1} parent=23 // pred_region
          %308 = vsyncadd %s264, 16
        $region148: #{tpu_custom_call.1} parent=23 // pred_fallthru
          _
        %s309 = sadd.s32 %s115, 4
        %s310 = sld [smem:[#allocation4 + %s309]]
        %s311 = scalar_lea.vmem [#allocation5], %s310
        %s312 = scalar_lea.vmem %s114, 4 [#allocation8]
        %s313 = scalar_lea.sflag [#allocation2], 4
        %p315 = scmp.lt.u32.totalorder 1, 8
        %p316 = pneg %p315
        // Predicated region
        $region149: #{tpu_custom_call.1} parent=23 // pred_check
          _
        $region150: #{tpu_custom_call.1} parent=23 // pred_check_branch
          %318 = sbr.rel (%p315) target = $region152
        $region151: #{tpu_custom_call.1} parent=23 // pred_region
          %s333 = sand.u32 1, 7
          %p334 = scmp.eq.s32.totalorder %s333, 0
          %p335 = pneg %p334
          // Predicated region
          $region164: #{tpu_custom_call.1} parent=151 // pred_check
            _
          $region165: #{tpu_custom_call.1} parent=151 // pred_check_branch
            %337 = sbr.rel (%p334) target = $region167
          $region166: #{tpu_custom_call.1} parent=151 // pred_region
            %s338 = sand.u32 1, 7
            %s339 = ssub.s32 1, %s338
            %s340 = scalar_lea.vmem %s311, %s339 [#allocation5]
            %s341 = ssub.s32 1, %s338
            %s342 = scalar_lea.vmem %s312, %s341 [#allocation8]
            %s343 = sshllo.u32 0, %s338
            loop: start=0, step=1, limit=1
            $region168: #{tpu_custom_call.1} parent=166 // loop_pre_header
              _
            $region169: #{tpu_custom_call.1} parent=166 // loop_header
              %s345 = sphi 0, %s349
              %p346 = scmp.ge.s32.totalorder %s345, 1
              %s350 = sphi %s340, %s340
              %s351 = sphi %s342, %s342
            $region170: #{tpu_custom_call.1} parent=166 // loop_header_branch
              %348 = sbr.rel (%p346) target = $region174
            $region171: #{tpu_custom_call.1} parent=166 // loop_body
              %v352 = vld [vmem:[%s350] sm:%s343]
              %353 = vst [vmem:[%s351] sm:%s343] %v352
            $region172: #{tpu_custom_call.1} parent=166 // loop_footer
              %s349 = sadd.s32 1, %s345
            $region173: #{tpu_custom_call.1} parent=166 // loop_footer_branch
              %344 = sbr.rel target = $region169
            $region174: #{tpu_custom_call.1} parent=166 // loop_exit
              _
          $region167: #{tpu_custom_call.1} parent=151 // pred_fallthru
            _
        $region152: #{tpu_custom_call.1} parent=23 // pred_fallthru
          _
        // Predicated region
        $region153: #{tpu_custom_call.1} parent=23 // pred_check
          %p319 = pneg %p315
        $region154: #{tpu_custom_call.1} parent=23 // pred_check_branch
          %321 = sbr.rel (%p319) target = $region156
        $region155: #{tpu_custom_call.1} parent=23 // pred_region
          %s322 = sshllo.u32 0, 1
          loop: start=0, step=1, limit=1
          $region157: #{tpu_custom_call.1} parent=155 // loop_pre_header
            _
          $region158: #{tpu_custom_call.1} parent=155 // loop_header
            %s324 = sphi 0, %s328
            %p325 = scmp.ge.s32.totalorder %s324, 1
            %s329 = sphi %s311, %s311
            %s330 = sphi %s312, %s312
          $region159: #{tpu_custom_call.1} parent=155 // loop_header_branch
            %327 = sbr.rel (%p325) target = $region163
          $region160: #{tpu_custom_call.1} parent=155 // loop_body
            %v331 = vld [vmem:[%s329] sm:%s322]
            %332 = vst [vmem:[%s330] sm:%s322] %v331
          $region161: #{tpu_custom_call.1} parent=155 // loop_footer
            %s328 = sadd.s32 1, %s324
          $region162: #{tpu_custom_call.1} parent=155 // loop_footer_branch
            %323 = sbr.rel target = $region158
          $region163: #{tpu_custom_call.1} parent=155 // loop_exit
            _
        $region156: #{tpu_custom_call.1} parent=23 // pred_fallthru
          _
        // Predicated region
        $region175: #{tpu_custom_call.1} parent=23 // pred_check
          _
        $region176: #{tpu_custom_call.1} parent=23 // pred_check_branch
          %356 = sbr.rel (0) target = $region178
        $region177: #{tpu_custom_call.1} parent=23 // pred_region
          %357 = vsyncadd %s313, 16
        $region178: #{tpu_custom_call.1} parent=23 // pred_fallthru
          _
        %s358 = sadd.s32 %s115, 5
        %s359 = sld [smem:[#allocation4 + %s358]]
        %s360 = scalar_lea.vmem [#allocation5], %s359
        %s361 = scalar_lea.vmem %s114, 5 [#allocation8]
        %s362 = scalar_lea.sflag [#allocation2], 5
        %p364 = scmp.lt.u32.totalorder 1, 8
        %p365 = pneg %p364
        // Predicated region
        $region179: #{tpu_custom_call.1} parent=23 // pred_check
          _
        $region180: #{tpu_custom_call.1} parent=23 // pred_check_branch
          %367 = sbr.rel (%p364) target = $region182
        $region181: #{tpu_custom_call.1} parent=23 // pred_region
          %s382 = sand.u32 1, 7
          %p383 = scmp.eq.s32.totalorder %s382, 0
          %p384 = pneg %p383
          // Predicated region
          $region194: #{tpu_custom_call.1} parent=181 // pred_check
            _
          $region195: #{tpu_custom_call.1} parent=181 // pred_check_branch
            %386 = sbr.rel (%p383) target = $region197
          $region196: #{tpu_custom_call.1} parent=181 // pred_region
            %s387 = sand.u32 1, 7
            %s388 = ssub.s32 1, %s387
            %s389 = scalar_lea.vmem %s360, %s388 [#allocation5]
            %s390 = ssub.s32 1, %s387
            %s391 = scalar_lea.vmem %s361, %s390 [#allocation8]
            %s392 = sshllo.u32 0, %s387
            loop: start=0, step=1, limit=1
            $region198: #{tpu_custom_call.1} parent=196 // loop_pre_header
              _
            $region199: #{tpu_custom_call.1} parent=196 // loop_header
              %s394 = sphi 0, %s398
              %p395 = scmp.ge.s32.totalorder %s394, 1
              %s399 = sphi %s389, %s389
              %s400 = sphi %s391, %s391
            $region200: #{tpu_custom_call.1} parent=196 // loop_header_branch
              %397 = sbr.rel (%p395) target = $region204
            $region201: #{tpu_custom_call.1} parent=196 // loop_body
              %v401 = vld [vmem:[%s399] sm:%s392]
              %402 = vst [vmem:[%s400] sm:%s392] %v401
            $region202: #{tpu_custom_call.1} parent=196 // loop_footer
              %s398 = sadd.s32 1, %s394
            $region203: #{tpu_custom_call.1} parent=196 // loop_footer_branch
              %393 = sbr.rel target = $region199
            $region204: #{tpu_custom_call.1} parent=196 // loop_exit
              _
          $region197: #{tpu_custom_call.1} parent=181 // pred_fallthru
            _
        $region182: #{tpu_custom_call.1} parent=23 // pred_fallthru
          _
        // Predicated region
        $region183: #{tpu_custom_call.1} parent=23 // pred_check
          %p368 = pneg %p364
        $region184: #{tpu_custom_call.1} parent=23 // pred_check_branch
          %370 = sbr.rel (%p368) target = $region186
        $region185: #{tpu_custom_call.1} parent=23 // pred_region
          %s371 = sshllo.u32 0, 1
          loop: start=0, step=1, limit=1
          $region187: #{tpu_custom_call.1} parent=185 // loop_pre_header
            _
          $region188: #{tpu_custom_call.1} parent=185 // loop_header
            %s373 = sphi 0, %s377
            %p374 = scmp.ge.s32.totalorder %s373, 1
            %s378 = sphi %s360, %s360
            %s379 = sphi %s361, %s361
          $region189: #{tpu_custom_call.1} parent=185 // loop_header_branch
            %376 = sbr.rel (%p374) target = $region193
          $region190: #{tpu_custom_call.1} parent=185 // loop_body
            %v380 = vld [vmem:[%s378] sm:%s371]
            %381 = vst [vmem:[%s379] sm:%s371] %v380
          $region191: #{tpu_custom_call.1} parent=185 // loop_footer
            %s377 = sadd.s32 1, %s373
          $region192: #{tpu_custom_call.1} parent=185 // loop_footer_branch
            %372 = sbr.rel target = $region188
          $region193: #{tpu_custom_call.1} parent=185 // loop_exit
            _
        $region186: #{tpu_custom_call.1} parent=23 // pred_fallthru
          _
        // Predicated region
        $region205: #{tpu_custom_call.1} parent=23 // pred_check
          _
        $region206: #{tpu_custom_call.1} parent=23 // pred_check_branch
          %405 = sbr.rel (0) target = $region208
        $region207: #{tpu_custom_call.1} parent=23 // pred_region
          %406 = vsyncadd %s362, 16
        $region208: #{tpu_custom_call.1} parent=23 // pred_fallthru
          _
        %s407 = sadd.s32 %s115, 6
        %s408 = sld [smem:[#allocation4 + %s407]]
        %s409 = scalar_lea.vmem [#allocation5], %s408
        %s410 = scalar_lea.vmem %s114, 6 [#allocation8]
        %s411 = scalar_lea.sflag [#allocation2], 6
        %p413 = scmp.lt.u32.totalorder 1, 8
        %p414 = pneg %p413
        // Predicated region
        $region209: #{tpu_custom_call.1} parent=23 // pred_check
          _
        $region210: #{tpu_custom_call.1} parent=23 // pred_check_branch
          %416 = sbr.rel (%p413) target = $region212
        $region211: #{tpu_custom_call.1} parent=23 // pred_region
          %s431 = sand.u32 1, 7
          %p432 = scmp.eq.s32.totalorder %s431, 0
          %p433 = pneg %p432
          // Predicated region
          $region224: #{tpu_custom_call.1} parent=211 // pred_check
            _
          $region225: #{tpu_custom_call.1} parent=211 // pred_check_branch
            %435 = sbr.rel (%p432) target = $region227
          $region226: #{tpu_custom_call.1} parent=211 // pred_region
            %s436 = sand.u32 1, 7
            %s437 = ssub.s32 1, %s436
            %s438 = scalar_lea.vmem %s409, %s437 [#allocation5]
            %s439 = ssub.s32 1, %s436
            %s440 = scalar_lea.vmem %s410, %s439 [#allocation8]
            %s441 = sshllo.u32 0, %s436
            loop: start=0, step=1, limit=1
            $region228: #{tpu_custom_call.1} parent=226 // loop_pre_header
              _
            $region229: #{tpu_custom_call.1} parent=226 // loop_header
              %s443 = sphi 0, %s447
              %p444 = scmp.ge.s32.totalorder %s443, 1
              %s448 = sphi %s438, %s438
              %s449 = sphi %s440, %s440
            $region230: #{tpu_custom_call.1} parent=226 // loop_header_branch
              %446 = sbr.rel (%p444) target = $region234
            $region231: #{tpu_custom_call.1} parent=226 // loop_body
              %v450 = vld [vmem:[%s448] sm:%s441]
              %451 = vst [vmem:[%s449] sm:%s441] %v450
            $region232: #{tpu_custom_call.1} parent=226 // loop_footer
              %s447 = sadd.s32 1, %s443
            $region233: #{tpu_custom_call.1} parent=226 // loop_footer_branch
              %442 = sbr.rel target = $region229
            $region234: #{tpu_custom_call.1} parent=226 // loop_exit
              _
          $region227: #{tpu_custom_call.1} parent=211 // pred_fallthru
            _
        $region212: #{tpu_custom_call.1} parent=23 // pred_fallthru
          _
        // Predicated region
        $region213: #{tpu_custom_call.1} parent=23 // pred_check
          %p417 = pneg %p413
        $region214: #{tpu_custom_call.1} parent=23 // pred_check_branch
          %419 = sbr.rel (%p417) target = $region216
        $region215: #{tpu_custom_call.1} parent=23 // pred_region
          %s420 = sshllo.u32 0, 1
          loop: start=0, step=1, limit=1
          $region217: #{tpu_custom_call.1} parent=215 // loop_pre_header
            _
          $region218: #{tpu_custom_call.1} parent=215 // loop_header
            %s422 = sphi 0, %s426
            %p423 = scmp.ge.s32.totalorder %s422, 1
            %s427 = sphi %s409, %s409
            %s428 = sphi %s410, %s410
          $region219: #{tpu_custom_call.1} parent=215 // loop_header_branch
            %425 = sbr.rel (%p423) target = $region223
          $region220: #{tpu_custom_call.1} parent=215 // loop_body
            %v429 = vld [vmem:[%s427] sm:%s420]
            %430 = vst [vmem:[%s428] sm:%s420] %v429
          $region221: #{tpu_custom_call.1} parent=215 // loop_footer
            %s426 = sadd.s32 1, %s422
          $region222: #{tpu_custom_call.1} parent=215 // loop_footer_branch
            %421 = sbr.rel target = $region218
          $region223: #{tpu_custom_call.1} parent=215 // loop_exit
            _
        $region216: #{tpu_custom_call.1} parent=23 // pred_fallthru
          _
        // Predicated region
        $region235: #{tpu_custom_call.1} parent=23 // pred_check
          _
        $region236: #{tpu_custom_call.1} parent=23 // pred_check_branch
          %454 = sbr.rel (0) target = $region238
        $region237: #{tpu_custom_call.1} parent=23 // pred_region
          %455 = vsyncadd %s411, 16
        $region238: #{tpu_custom_call.1} parent=23 // pred_fallthru
          _
        %s456 = sadd.s32 %s115, 7
        %s457 = sld [smem:[#allocation4 + %s456]]
        %s458 = scalar_lea.vmem [#allocation5], %s457
        %s459 = scalar_lea.vmem %s114, 7 [#allocation8]
        %s460 = scalar_lea.sflag [#allocation2], 7
        %p462 = scmp.lt.u32.totalorder 1, 8
        %p463 = pneg %p462
        // Predicated region
        $region239: #{tpu_custom_call.1} parent=23 // pred_check
          _
        $region240: #{tpu_custom_call.1} parent=23 // pred_check_branch
          %465 = sbr.rel (%p462) target = $region242
        $region241: #{tpu_custom_call.1} parent=23 // pred_region
          %s480 = sand.u32 1, 7
          %p481 = scmp.eq.s32.totalorder %s480, 0
          %p482 = pneg %p481
          // Predicated region
          $region254: #{tpu_custom_call.1} parent=241 // pred_check
            _
          $region255: #{tpu_custom_call.1} parent=241 // pred_check_branch
            %484 = sbr.rel (%p481) target = $region257
          $region256: #{tpu_custom_call.1} parent=241 // pred_region
            %s485 = sand.u32 1, 7
            %s486 = ssub.s32 1, %s485
            %s487 = scalar_lea.vmem %s458, %s486 [#allocation5]
            %s488 = ssub.s32 1, %s485
            %s489 = scalar_lea.vmem %s459, %s488 [#allocation8]
            %s490 = sshllo.u32 0, %s485
            loop: start=0, step=1, limit=1
            $region258: #{tpu_custom_call.1} parent=256 // loop_pre_header
              _
            $region259: #{tpu_custom_call.1} parent=256 // loop_header
              %s492 = sphi 0, %s496
              %p493 = scmp.ge.s32.totalorder %s492, 1
              %s497 = sphi %s487, %s487
              %s498 = sphi %s489, %s489
            $region260: #{tpu_custom_call.1} parent=256 // loop_header_branch
              %495 = sbr.rel (%p493) target = $region264
            $region261: #{tpu_custom_call.1} parent=256 // loop_body
              %v499 = vld [vmem:[%s497] sm:%s490]
              %500 = vst [vmem:[%s498] sm:%s490] %v499
            $region262: #{tpu_custom_call.1} parent=256 // loop_footer
              %s496 = sadd.s32 1, %s492
            $region263: #{tpu_custom_call.1} parent=256 // loop_footer_branch
              %491 = sbr.rel target = $region259
            $region264: #{tpu_custom_call.1} parent=256 // loop_exit
              _
          $region257: #{tpu_custom_call.1} parent=241 // pred_fallthru
            _
        $region242: #{tpu_custom_call.1} parent=23 // pred_fallthru
          _
        // Predicated region
        $region243: #{tpu_custom_call.1} parent=23 // pred_check
          %p466 = pneg %p462
        $region244: #{tpu_custom_call.1} parent=23 // pred_check_branch
          %468 = sbr.rel (%p466) target = $region246
        $region245: #{tpu_custom_call.1} parent=23 // pred_region
          %s469 = sshllo.u32 0, 1
          loop: start=0, step=1, limit=1
          $region247: #{tpu_custom_call.1} parent=245 // loop_pre_header
            _
          $region248: #{tpu_custom_call.1} parent=245 // loop_header
            %s471 = sphi 0, %s475
            %p472 = scmp.ge.s32.totalorder %s471, 1
            %s476 = sphi %s458, %s458
            %s477 = sphi %s459, %s459
          $region249: #{tpu_custom_call.1} parent=245 // loop_header_branch
            %474 = sbr.rel (%p472) target = $region253
          $region250: #{tpu_custom_call.1} parent=245 // loop_body
            %v478 = vld [vmem:[%s476] sm:%s469]
            %479 = vst [vmem:[%s477] sm:%s469] %v478
          $region251: #{tpu_custom_call.1} parent=245 // loop_footer
            %s475 = sadd.s32 1, %s471
          $region252: #{tpu_custom_call.1} parent=245 // loop_footer_branch
            %470 = sbr.rel target = $region248
          $region253: #{tpu_custom_call.1} parent=245 // loop_exit
            _
        $region246: #{tpu_custom_call.1} parent=23 // pred_fallthru
          _
        // Predicated region
        $region265: #{tpu_custom_call.1} parent=23 // pred_check
          _
        $region266: #{tpu_custom_call.1} parent=23 // pred_check_branch
          %503 = sbr.rel (0) target = $region268
        $region267: #{tpu_custom_call.1} parent=23 // pred_region
          %504 = vsyncadd %s460, 16
        $region268: #{tpu_custom_call.1} parent=23 // pred_fallthru
          _
        loop: start=0, step=1, limit=8
        $region269: #{tpu_custom_call.1} parent=23 // loop_pre_header
          _
        $region270: #{tpu_custom_call.1} parent=23 // loop_header
          %s506 = sphi 0, %s510
          %p507 = scmp.ge.s32.totalorder %s506, 8
        $region271: #{tpu_custom_call.1} parent=23 // loop_header_branch
          %509 = sbr.rel (%p507) target = $region275
        $region272: #{tpu_custom_call.1} parent=23 // loop_body
          %p511 = scmp.lt.s32.totalorder %s506, 0
          %s512 = ssub.s32 0, %s506
          %s513 = scalar_select %p511, %s512, %s506
          %s514 = sand.u32 %s513, 15
          %s515 = ssub.s32 0, %s514
          %s516 = scalar_select %p511, %s515, %s514
          %p517 = scmp.ne.s32.totalorder %s516, 0
          %p518 = scmp.lt.s32.totalorder %s516, 0
          %p519 = pnand %p518, %p517
          %p520 = pneg %p519
          %s521 = sadd.s32 %s516, 16
          %s522 = scalar_select %p520, %s521, %s516
          %s523 = scalar_lea.sflag [#allocation2], %s522
          %s524 = smul.u32 1, 1
          %s525 = sshll.u32 %s524, 4
          %526 = dma.done %s523, %s525
          %s527 = sadd.s32 %s506, 16
          %p528 = scmp.lt.s32.totalorder %s527, 8
          // Predicated region
          $region276: #{tpu_custom_call.1} parent=272 // pred_check
            %p529 = pneg %p528
          $region277: #{tpu_custom_call.1} parent=272 // pred_check_branch
            %531 = sbr.rel (%p529) target = $region279
          $region278: #{tpu_custom_call.1} parent=272 // pred_region
            %s532 = sadd.s32 %s115, %s527
            %s533 = sld [smem:[#allocation4 + %s532]]
            %p534 = scmp.lt.s32.totalorder %s527, 0
            %s535 = ssub.s32 0, %s527
            %s536 = scalar_select %p534, %s535, %s527
            %s537 = sand.u32 %s536, 15
            %s538 = ssub.s32 0, %s537
            %s539 = scalar_select %p534, %s538, %s537
            %p540 = scmp.ne.s32.totalorder %s539, 0
            %p541 = scmp.lt.s32.totalorder %s539, 0
            %p542 = pnand %p541, %p540
            %p543 = pneg %p542
            %s544 = sadd.s32 %s539, 16
            %s545 = scalar_select %p543, %s544, %s539
            %s546 = scalar_lea.vmem [#allocation5], %s533
            %s547 = scalar_lea.vmem %s114, %s527 [#allocation8]
            %s548 = scalar_lea.sflag [#allocation2], %s545
            %p550 = scmp.lt.u32.totalorder 1, 8
            %p551 = pneg %p550
            // Predicated region
            $region280: #{tpu_custom_call.1} parent=278 // pred_check
              _
            $region281: #{tpu_custom_call.1} parent=278 // pred_check_branch
              %553 = sbr.rel (%p550) target = $region283
            $region282: #{tpu_custom_call.1} parent=278 // pred_region
              %s568 = sand.u32 1, 7
              %p569 = scmp.eq.s32.totalorder %s568, 0
              %p570 = pneg %p569
              // Predicated region
              $region295: #{tpu_custom_call.1} parent=282 // pred_check
                _
              $region296: #{tpu_custom_call.1} parent=282 // pred_check_branch
                %572 = sbr.rel (%p569) target = $region298
              $region297: #{tpu_custom_call.1} parent=282 // pred_region
                %s573 = sand.u32 1, 7
                %s574 = ssub.s32 1, %s573
                %s575 = scalar_lea.vmem %s546, %s574 [#allocation5]
                %s576 = ssub.s32 1, %s573
                %s577 = scalar_lea.vmem %s547, %s576 [#allocation8]
                %s578 = sshllo.u32 0, %s573
                loop: start=0, step=1, limit=1
                $region299: #{tpu_custom_call.1} parent=297 // loop_pre_header
                  _
                $region300: #{tpu_custom_call.1} parent=297 // loop_header
                  %s580 = sphi 0, %s584
                  %p581 = scmp.ge.s32.totalorder %s580, 1
                  %s585 = sphi %s575, %s575
                  %s586 = sphi %s577, %s577
                $region301: #{tpu_custom_call.1} parent=297 // loop_header_branch
                  %583 = sbr.rel (%p581) target = $region305
                $region302: #{tpu_custom_call.1} parent=297 // loop_body
                  %v587 = vld [vmem:[%s585] sm:%s578]
                  %588 = vst [vmem:[%s586] sm:%s578] %v587
                $region303: #{tpu_custom_call.1} parent=297 // loop_footer
                  %s584 = sadd.s32 1, %s580
                $region304: #{tpu_custom_call.1} parent=297 // loop_footer_branch
                  %579 = sbr.rel target = $region300
                $region305: #{tpu_custom_call.1} parent=297 // loop_exit
                  _
              $region298: #{tpu_custom_call.1} parent=282 // pred_fallthru
                _
            $region283: #{tpu_custom_call.1} parent=278 // pred_fallthru
              _
            // Predicated region
            $region284: #{tpu_custom_call.1} parent=278 // pred_check
              %p554 = pneg %p550
            $region285: #{tpu_custom_call.1} parent=278 // pred_check_branch
              %556 = sbr.rel (%p554) target = $region287
            $region286: #{tpu_custom_call.1} parent=278 // pred_region
              %s557 = sshllo.u32 0, 1
              loop: start=0, step=1, limit=1
              $region288: #{tpu_custom_call.1} parent=286 // loop_pre_header
                _
              $region289: #{tpu_custom_call.1} parent=286 // loop_header
                %s559 = sphi 0, %s563
                %p560 = scmp.ge.s32.totalorder %s559, 1
                %s564 = sphi %s546, %s546
                %s565 = sphi %s547, %s547
              $region290: #{tpu_custom_call.1} parent=286 // loop_header_branch
                %562 = sbr.rel (%p560) target = $region294
              $region291: #{tpu_custom_call.1} parent=286 // loop_body
                %v566 = vld [vmem:[%s564] sm:%s557]
                %567 = vst [vmem:[%s565] sm:%s557] %v566
              $region292: #{tpu_custom_call.1} parent=286 // loop_footer
                %s563 = sadd.s32 1, %s559
              $region293: #{tpu_custom_call.1} parent=286 // loop_footer_branch
                %558 = sbr.rel target = $region289
              $region294: #{tpu_custom_call.1} parent=286 // loop_exit
                _
            $region287: #{tpu_custom_call.1} parent=278 // pred_fallthru
              _
            // Predicated region
            $region306: #{tpu_custom_call.1} parent=278 // pred_check
              _
            $region307: #{tpu_custom_call.1} parent=278 // pred_check_branch
              %591 = sbr.rel (0) target = $region309
            $region308: #{tpu_custom_call.1} parent=278 // pred_region
              %592 = vsyncadd %s548, 16
            $region309: #{tpu_custom_call.1} parent=278 // pred_fallthru
              _
          $region279: #{tpu_custom_call.1} parent=272 // pred_fallthru
            _
        $region273: #{tpu_custom_call.1} parent=23 // loop_footer
          %s510 = sadd.s32 1, %s506
        $region274: #{tpu_custom_call.1} parent=23 // loop_footer_branch
          %505 = sbr.rel target = $region270
        $region275: #{tpu_custom_call.1} parent=23 // loop_exit
          _
        %s593 = sand.u32 %s50, 1
        %s594 = scalar_lea.sflag [#allocation7], %s593
        %s595 = sand.u32 %s50, 1
        %s596 = smul.addr %s595, 8
        %s597 = scalar_lea.vmem [#allocation8], %s596
        // Predicated region
        $region310: #{tpu_custom_call.1} parent=23 // pred_check
          %p598 = pneg %p60
        $region311: #{tpu_custom_call.1} parent=23 // pred_check_branch
          %600 = sbr.rel (%p598) target = $region313
        $region312: #{tpu_custom_call.1} parent=23 // pred_region
          %s602 = ssub.s32 128, 128
          %603 = vsyncadd %s594, %s602
          %s604 = smul.addr %s21, 128
          %s605 = scalar_lea.hbm %s2, %s604
          %s607 = sshll.u32 %s597, 4
          %s608 = int_to_ptr.vmem [resolvable:$true] %s607
          %610 = dma.vmem_to_hbm [thread:$0]  %s608, 128, %s605, %s594
        $region313: #{tpu_custom_call.1} parent=23 // pred_fallthru
          _
      $region24: #{tpu_custom_call.1} parent=5 // pred_fallthru
        _
      %p611 = scmp.le.s32.totalorder 2, %s16
      // Predicated region
      $region314: #{tpu_custom_call.1} parent=5 // pred_check
        %p612 = pneg %p611
      $region315: #{tpu_custom_call.1} parent=5 // pred_check_branch
        %614 = sbr.rel (%p612) target = $region317
      $region316: #{tpu_custom_call.1} parent=5 // pred_region
        %s615 = ssub.s32 %s16, 2
        // Predicated region
        $region318: #{tpu_custom_call.1} parent=316 // pred_check
          %p616 = pneg %p66
        $region319: #{tpu_custom_call.1} parent=316 // pred_check_branch
          %618 = sbr.rel (%p616) target = $region321
        $region320: #{tpu_custom_call.1} parent=316 // pred_region
          %s619 = sand.u32 %s51, 1
          %s620 = scalar_lea.sflag [#allocation7], %s619
          %s621 = sand.u32 %s51, 1
          %s622 = smul.addr %s621, 8
          %s623 = scalar_lea.vmem [#allocation8], %s622
          %624 = dma.done %s620, 128
        $region321: #{tpu_custom_call.1} parent=316 // pred_fallthru
          _
      $region317: #{tpu_custom_call.1} parent=5 // pred_fallthru
        _
    $region6: #{tpu_custom_call.1} parent=1 // loop_footer
      %s20 = sadd.s32 1, %s16
    $region7: #{tpu_custom_call.1} parent=1 // loop_footer_branch
      %15 = sbr.rel target = $region3
    $region8: #{tpu_custom_call.1} parent=1 // loop_exit
      _
    %625 = vsyncpa [#allocation6], 1
    %s626 = scalar_lea.sflag [#allocation6], 1
    %627 = vsyncpa %s626, 1
    %628 = vsyncpa [#allocation7], 1
    %s629 = scalar_lea.sflag [#allocation7], 1
    %630 = vsyncpa %s629, 1
  %631 = vsyncmov [#allocation2]
  %s632 = vpop.sfrf %631
  %p633 = scmp.eq.s32.totalorder %s632, 0
  %p634 = pneg %p633
  %636 = shalt.err (%p634)
  %s637 = scalar_lea.sflag [#allocation2], 1
  %638 = vsyncmov %s637
  %s639 = vpop.sfrf %638
  %p640 = scmp.eq.s32.totalorder %s639, 0
  %p641 = pneg %p640
  %643 = shalt.err (%p641)
  %s644 = scalar_lea.sflag [#allocation2], 2
  %645 = vsyncmov %s644
  %s646 = vpop.sfrf %645
  %p647 = scmp.eq.s32.totalorder %s646, 0
  %p648 = pneg %p647
  %650 = shalt.err (%p648)
  %s651 = scalar_lea.sflag [#allocation2], 3
  %652 = vsyncmov %s651
  %s653 = vpop.sfrf %652
  %p654 = scmp.eq.s32.totalorder %s653, 0
  %p655 = pneg %p654
  %657 = shalt.err (%p655)
  %s658 = scalar_lea.sflag [#allocation2], 4
  %659 = vsyncmov %s658
  %s660 = vpop.sfrf %659
  %p661 = scmp.eq.s32.totalorder %s660, 0
  %p662 = pneg %p661
  %664 = shalt.err (%p662)
  %s665 = scalar_lea.sflag [#allocation2], 5
  %666 = vsyncmov %s665
  %s667 = vpop.sfrf %666
  %p668 = scmp.eq.s32.totalorder %s667, 0
  %p669 = pneg %p668
  %671 = shalt.err (%p669)
  %s672 = scalar_lea.sflag [#allocation2], 6
  %673 = vsyncmov %s672
  %s674 = vpop.sfrf %673
  %p675 = scmp.eq.s32.totalorder %s674, 0
  %p676 = pneg %p675
  %678 = shalt.err (%p676)
  %s679 = scalar_lea.sflag [#allocation2], 7
  %680 = vsyncmov %s679
  %s681 = vpop.sfrf %680
  %p682 = scmp.eq.s32.totalorder %s681, 0
  %p683 = pneg %p682
  %685 = shalt.err (%p683)
  %s686 = scalar_lea.sflag [#allocation2], 8
  %687 = vsyncmov %s686
  %s688 = vpop.sfrf %687
  %p689 = scmp.eq.s32.totalorder %s688, 0
  %p690 = pneg %p689
  %692 = shalt.err (%p690)
  %s693 = scalar_lea.sflag [#allocation2], 9
  %694 = vsyncmov %s693
  %s695 = vpop.sfrf %694
  %p696 = scmp.eq.s32.totalorder %s695, 0
  %p697 = pneg %p696
  %699 = shalt.err (%p697)
  %s700 = scalar_lea.sflag [#allocation2], 10
  %701 = vsyncmov %s700
  %s702 = vpop.sfrf %701
  %p703 = scmp.eq.s32.totalorder %s702, 0
  %p704 = pneg %p703
  %706 = shalt.err (%p704)
  %s707 = scalar_lea.sflag [#allocation2], 11
  %708 = vsyncmov %s707
  %s709 = vpop.sfrf %708
  %p710 = scmp.eq.s32.totalorder %s709, 0
  %p711 = pneg %p710
  %713 = shalt.err (%p711)
  %s714 = scalar_lea.sflag [#allocation2], 12
  %715 = vsyncmov %s714
  %s716 = vpop.sfrf %715
  %p717 = scmp.eq.s32.totalorder %s716, 0
  %p718 = pneg %p717
  %720 = shalt.err (%p718)
  %s721 = scalar_lea.sflag [#allocation2], 13
  %722 = vsyncmov %s721
  %s723 = vpop.sfrf %722
  %p724 = scmp.eq.s32.totalorder %s723, 0
  %p725 = pneg %p724
  %727 = shalt.err (%p725)
  %s728 = scalar_lea.sflag [#allocation2], 14
  %729 = vsyncmov %s728
  %s730 = vpop.sfrf %729
  %p731 = scmp.eq.s32.totalorder %s730, 0
  %p732 = pneg %p731
  %734 = shalt.err (%p732)
  %s735 = scalar_lea.sflag [#allocation2], 15
  %736 = vsyncmov %s735
  %s737 = vpop.sfrf %736
  %p738 = scmp.eq.s32.totalorder %s737, 0
  %p739 = pneg %p738
  %741 = shalt.err (%p739)

</llo_original>
